<compile_context>
chip_gen: v7x
topology: tpu7x:2x2x1
jax: 0.10.0
libtpu: 0.0.40
codegen_flags: <defaults>
</compile_context>

<pallas_src>
import jax
import jax.numpy as jnp
from jax.experimental import pallas as pl
from jax.experimental.pallas import tpu as pltpu

D_IN = 512       # classifier input features
D_HID = 256      # hidden features
NUM_CLASSES = 16
NC_PAD = 128     # lane-dense padded output width (one vreg row)
BN_EPS = 1e-5


def facenet_classifier_kernel(
    x_ref,        # (TB, 512)     f32,  VMEM (cast to bf16 in-kernel)
    w1_ref,       # (512, 256)    bf16, VMEM, resident across batch tiles (BN folded)
    b1_ref,       # (1, 256)      f32,  VMEM, resident (BN folded)
    alpha_ref,    # (1, 1)        f32,  SMEM (PReLU parameter)
    w2_ref,       # (256, 128)    bf16, VMEM, resident (lane-padded)
    b2_ref,       # (1, 128)      f32,  VMEM, resident (lane-padded)
    o_ref,        # (TB, 128)     bf16, VMEM (lane-padded)
):
    # Linear(512 -> 256) with BatchNorm folded into the weights/bias.
    x = x_ref[...].astype(jnp.bfloat16)
    h = jnp.dot(x, w1_ref[...], preferred_element_type=jnp.float32)
    h = h + b1_ref[...]

    # PReLU (single shared parameter, PyTorch default num_parameters=1).
    a = alpha_ref[0, 0]
    h = jnp.where(h >= 0.0, h, a * h)

    # Linear(256 -> NC) on padded lanes.
    out = jnp.dot(h.astype(jnp.bfloat16), w2_ref[...],
                  preferred_element_type=jnp.float32)
    o_ref[...] = (out + b2_ref[...]).astype(o_ref.dtype)


def prepare_params(raw_params):
    """Fold BN running stats into Linear-1, cast weights to bf16, pad NC->128."""
    (w1, b1, gamma, beta, mean, var, alpha, w2, b2) = raw_params
    scale = gamma * jax.lax.rsqrt(var + BN_EPS)          # (1, 256)
    w1_f = (w1 * scale).astype(jnp.bfloat16)             # (512, 256)
    b1_f = (b1 - mean) * scale + beta                    # (1, 256) f32
    nc = w2.shape[1]
    w2_p = jnp.zeros((D_HID, NC_PAD), jnp.float32).at[:, :nc].set(w2)
    b2_p = jnp.zeros((1, NC_PAD), jnp.float32).at[:, :nc].set(b2)
    return (w1_f, b1_f, alpha, w2_p.astype(jnp.bfloat16), b2_p)


def _pick_tile_batch(batch, requested=None):
    """Batch tile: multiples of 256 preferred (2x256^2 MXU on v6e/v7x), at least a
    multiple of 16 so bf16 tiles fill whole (16,128) vregs; small batches run as a
    single full-extent tile."""
    if requested is not None:
        return int(max(1, min(requested, batch)))
    if batch <= 256:
        return batch
    for cand in (256, 128, 64, 32, 16, 8):
        if batch % cand == 0:
            return cand
    return 256  # ragged batch -> wrapper pads to a multiple


def facenet_forward(x, prepared_params, num_classes=NUM_CLASSES,
                    tile_batch=None, out_dtype=jnp.bfloat16):
    (w1, b1, alpha, w2, b2) = prepared_params
    batch = x.shape[0]
    tb = _pick_tile_batch(batch, tile_batch)
    padded_batch = pl.cdiv(batch, tb) * tb
    if padded_batch != batch:
        x = jnp.pad(x, ((0, padded_batch - batch), (0, 0)))
    nb = padded_batch // tb

    bytes_accessed = (
        padded_batch * D_IN * x.dtype.itemsize            # x streamed once
        + w1.size * 2 + b1.size * 4 + alpha.size * 4       # weights fetched once
        + w2.size * 2 + b2.size * 4
        + padded_batch * NC_PAD * jnp.dtype(out_dtype).itemsize
    )
    cost = pl.CostEstimate(
        flops=2 * padded_batch * (D_IN * D_HID + D_HID * NC_PAD),
        transcendentals=0,
        bytes_accessed=bytes_accessed,
    )

    out_padded = pl.pallas_call(
        facenet_classifier_kernel,
        out_shape=jax.ShapeDtypeStruct((padded_batch, NC_PAD), out_dtype),
        grid=(nb,),
        in_specs=[
            pl.BlockSpec((tb, D_IN), lambda i: (i, 0)),        # x: streamed batch tiles
            pl.BlockSpec((D_IN, D_HID), lambda i: (0, 0)),     # w1: VMEM-resident
            pl.BlockSpec((1, D_HID), lambda i: (0, 0)),        # b1: VMEM-resident
            pl.BlockSpec(memory_space=pltpu.SMEM),             # alpha scalar in SMEM
            pl.BlockSpec((D_HID, NC_PAD), lambda i: (0, 0)),   # w2: VMEM-resident
            pl.BlockSpec((1, NC_PAD), lambda i: (0, 0)),       # b2: VMEM-resident
        ],
        out_specs=pl.BlockSpec((tb, NC_PAD), lambda i: (i, 0)),
        compiler_params=pltpu.CompilerParams(
            dimension_semantics=("parallel",)),                # split tiles across TCs (v7x)
        cost_estimate=cost,
    )(x, w1, b1, alpha, w2, b2)

    # NOTE: padded logit columns [num_classes:128] are exactly 0.0 (not -inf);
    # always slice before any softmax/argmax downstream.
    return out_padded[:batch, :num_classes]


def init_params(key):
    """Deterministic init mirroring FaceNet.init_classifier_weights:
       Linear weights ~ N(0, 0.1), biases = 0; BatchNorm gamma=1, beta=0,
       running_mean=0, running_var=1; PReLU alpha=0.25."""
    k1, k2 = jax.random.split(key)
    # PyTorch Linear stores weight as (out, in); we keep the transposed
    # (in, out) layout so the kernel computes x @ W directly.
    w1 = jax.random.normal(k1, (D_IN, D_HID), jnp.float32) * 0.1
    b1 = jnp.zeros((1, D_HID), jnp.float32)
    gamma = jnp.ones((1, D_HID), jnp.float32)
    beta = jnp.zeros((1, D_HID), jnp.float32)
    mean = jnp.zeros((1, D_HID), jnp.float32)
    var = jnp.ones((1, D_HID), jnp.float32)
    alpha = jnp.full((1, 1), 0.25, jnp.float32)
    w2 = jax.random.normal(k2, (D_HID, NUM_CLASSES), jnp.float32) * 0.1
    b2 = jnp.zeros((1, NUM_CLASSES), jnp.float32)
    return (w1, b1, gamma, beta, mean, var, alpha, w2, b2)


def reference_forward_f32(x, raw_params):
    """Full-precision reference of the PyTorch classifier (inference BN)."""
    (w1, b1, gamma, beta, mean, var, alpha, w2, b2) = raw_params
    h = x @ w1 + b1
    h = (h - mean) * jax.lax.rsqrt(var + BN_EPS) * gamma + beta
    h = jnp.where(h >= 0.0, h, alpha[0, 0] * h)
    return h @ w2 + b2


def reference_forward_bf16(x, prepared_params, num_classes=NUM_CLASSES,
                           out_dtype=jnp.bfloat16):
    """Mirror of the kernel math in plain JAX (bf16 matmuls, f32 accumulation)."""
    (w1, b1, alpha, w2, b2) = prepared_params
    h = jnp.dot(x.astype(jnp.bfloat16), w1, preferred_element_type=jnp.float32)
    h = h + b1
    h = jnp.where(h >= 0.0, h, alpha[0, 0] * h)
    out = jnp.dot(h.astype(jnp.bfloat16), w2, preferred_element_type=jnp.float32)
    return (out + b2).astype(out_dtype)[:, :num_classes]


if __name__ == "__main__":
    key = jax.random.PRNGKey(0)
    kx, kp = jax.random.split(key)
    batch = 32
    x = jax.random.normal(kx, (batch, D_IN), jnp.float32)
    raw_params = init_params(kp)
    prepared = prepare_params(raw_params)

    # tile_batch=8 -> 4 grid steps: exercises VMEM-resident weights, streamed
    # batch tiles and the parallel dimension semantics at a small test size.
    out = facenet_forward(x, prepared, tile_batch=8)
    out = jax.block_until_ready(out)
    assert out.shape == (batch, NUM_CLASSES)
    assert out.dtype == jnp.bfloat16

    # Tight check: kernel plumbing vs. identical bf16 math in plain JAX
    # (tolerance allows one-ulp differences from accumulation order).
    ref_bf16 = reference_forward_bf16(x, prepared)
    assert jnp.allclose(out.astype(jnp.float32), ref_bf16.astype(jnp.float32),
                        atol=3e-2, rtol=3e-2)

    # Sanity check: semantics vs. full-precision PyTorch-equivalent forward
    # (loose tolerance accounts for intentional bf16 weights/activations/output).
    ref_f32 = reference_forward_f32(x, raw_params)
    assert jnp.allclose(out.astype(jnp.float32), ref_f32, atol=0.25, rtol=0.05)

    print("KERNEL_OK")
</pallas_src>

<mosaic_0001>
module attributes {stable_mosaic.version = 11 : i64} {
  func.func @facenet_classifier_kernel(%arg0: i32, %arg1: memref<8x512xf32, #tpu.memory_space<vmem>>, %arg2: memref<512x256xbf16, #tpu.memory_space<vmem>>, %arg3: memref<1x256xf32, #tpu.memory_space<vmem>>, %arg4: memref<1x1xf32, #tpu.memory_space<smem>>, %arg5: memref<256x128xbf16, #tpu.memory_space<vmem>>, %arg6: memref<1x128xf32, #tpu.memory_space<vmem>>, %arg7: memref<8x128xbf16, #tpu.memory_space<vmem>>) attributes {dimension_semantics = [#tpu.dimension_semantics<parallel>], iteration_bounds = array<i64: 4>, scalar_prefetch = 0 : i64, scratch_operands = 0 : i64, tpu.core_type = #tpu.core_type<tc>, window_params = [{transform_indices = @transform_0, window_bounds = array<i64: 8, 512>}, {pipeline_mode = #tpu.pipeline_mode<synchronous>, transform_indices = @transform_1, window_bounds = array<i64: 512, 256>}, {pipeline_mode = #tpu.pipeline_mode<synchronous>, transform_indices = @transform_2, window_bounds = array<i64: 1, 256>}, {transform_indices = @transform_3, window_bounds = array<i64: 1, 1>}, {pipeline_mode = #tpu.pipeline_mode<synchronous>, transform_indices = @transform_4, window_bounds = array<i64: 256, 128>}, {pipeline_mode = #tpu.pipeline_mode<synchronous>, transform_indices = @transform_5, window_bounds = array<i64: 1, 128>}, {transform_indices = @transform_6, window_bounds = array<i64: 8, 128>}]} {
    %c0 = arith.constant 0 : index
    %c0_0 = arith.constant 0 : index
    %0 = vector.load %arg1[%c0, %c0_0] : memref<8x512xf32, #tpu.memory_space<vmem>>, vector<8x512xf32>
    %1 = arith.truncf %0 : vector<8x512xf32> to vector<8x512xbf16>
    %c0_1 = arith.constant 0 : index
    %c0_2 = arith.constant 0 : index
    %2 = vector.load %arg2[%c0_1, %c0_2] : memref<512x256xbf16, #tpu.memory_space<vmem>>, vector<512x256xbf16>
    %cst = arith.constant dense<0.000000e+00> : vector<8x256xf32>
    %3 = tpu.matmul %1, %2, %cst {dimension_numbers = #tpu.dot_dimension_numbers<[1], [0], [0], [1], [0, 0, 1, 1], [], []>} : vector<8x512xbf16>, vector<512x256xbf16>, vector<8x256xf32> -> vector<8x256xf32>
    %c0_3 = arith.constant 0 : index
    %c0_4 = arith.constant 0 : index
    %4 = vector.load %arg3[%c0_3, %c0_4] : memref<1x256xf32, #tpu.memory_space<vmem>>, vector<1x256xf32>
    %5 = vector.broadcast %4 : vector<1x256xf32> to vector<8x256xf32>
    %6 = arith.addf %3, %5 : vector<8x256xf32>
    %c0_5 = arith.constant 0 : index
    %c0_6 = arith.constant 0 : index
    %7 = memref.load %arg4[%c0_5, %c0_6] : memref<1x1xf32, #tpu.memory_space<smem>>
    %cst_7 = arith.constant 0.000000e+00 : f32
    %8 = vector.broadcast %cst_7 : f32 to vector<8x256xf32>
    %9 = arith.cmpf oge, %6, %8 : vector<8x256xf32>
    %10 = vector.broadcast %7 : f32 to vector<8x256xf32>
    %11 = arith.mulf %10, %6 : vector<8x256xf32>
    %12 = arith.select %9, %6, %11 : vector<8x256xi1>, vector<8x256xf32>
    %13 = arith.truncf %12 : vector<8x256xf32> to vector<8x256xbf16>
    %c0_8 = arith.constant 0 : index
    %c0_9 = arith.constant 0 : index
    %14 = vector.load %arg5[%c0_8, %c0_9] : memref<256x128xbf16, #tpu.memory_space<vmem>>, vector<256x128xbf16>
    %cst_10 = arith.constant dense<0.000000e+00> : vector<8x128xf32>
    %15 = tpu.matmul %13, %14, %cst_10 {dimension_numbers = #tpu.dot_dimension_numbers<[1], [0], [0], [1], [0, 0, 1, 1], [], []>} : vector<8x256xbf16>, vector<256x128xbf16>, vector<8x128xf32> -> vector<8x128xf32>
    %c0_11 = arith.constant 0 : index
    %c0_12 = arith.constant 0 : index
    %16 = vector.load %arg6[%c0_11, %c0_12] : memref<1x128xf32, #tpu.memory_space<vmem>>, vector<1x128xf32>
    %17 = vector.broadcast %16 : vector<1x128xf32> to vector<8x128xf32>
    %18 = arith.addf %15, %17 : vector<8x128xf32>
    %19 = arith.truncf %18 : vector<8x128xf32> to vector<8x128xbf16>
    %c0_13 = arith.constant 0 : index
    %c0_14 = arith.constant 0 : index
    %20 = vector.load %arg7[%c0_13, %c0_14] : memref<8x128xbf16, #tpu.memory_space<vmem>>, vector<8x128xbf16>
    tpu.vector_store %arg7[%c0_13, %c0_14], %19 {strides = array<i32>} : memref<8x128xbf16, #tpu.memory_space<vmem>>, vector<8x128xbf16>,
    return
  }
  func.func @transform_0(%arg0: i32) -> (i32, i32) {
    %c0_i32 = arith.constant 0 : i32
    %c0_i32_0 = arith.constant 0 : i32
    return %arg0, %c0_i32 : i32, i32
  }
  func.func @transform_1(%arg0: i32) -> (i32, i32) {
    %c0_i32 = arith.constant 0 : i32
    %c0_i32_0 = arith.constant 0 : i32
    %c0_i32_1 = arith.constant 0 : i32
    return %c0_i32, %c0_i32_0 : i32, i32
  }
  func.func @transform_2(%arg0: i32) -> (i32, i32) {
    %c0_i32 = arith.constant 0 : i32
    %c0_i32_0 = arith.constant 0 : i32
    %c0_i32_1 = arith.constant 0 : i32
    return %c0_i32, %c0_i32_0 : i32, i32
  }
  func.func @transform_3(%arg0: i32) -> (i32, i32) {
    %c0_i32 = arith.constant 0 : i32
    %c0_i32_0 = arith.constant 0 : i32
    %c0_i32_1 = arith.constant 0 : i32
    return %c0_i32, %c0_i32_0 : i32, i32
  }
  func.func @transform_4(%arg0: i32) -> (i32, i32) {
    %c0_i32 = arith.constant 0 : i32
    %c0_i32_0 = arith.constant 0 : i32
    %c0_i32_1 = arith.constant 0 : i32
    return %c0_i32, %c0_i32_0 : i32, i32
  }
  func.func @transform_5(%arg0: i32) -> (i32, i32) {
    %c0_i32 = arith.constant 0 : i32
    %c0_i32_0 = arith.constant 0 : i32
    %c0_i32_1 = arith.constant 0 : i32
    return %c0_i32, %c0_i32_0 : i32, i32
  }
  func.func @transform_6(%arg0: i32) -> (i32, i32) {
    %c0_i32 = arith.constant 0 : i32
    %c0_i32_0 = arith.constant 0 : i32
    return %arg0, %c0_i32 : i32, i32
  }
}

</mosaic_0001>

<llo_original>
// kernel: tpu_custom_call.1
$region0: #{tpu_custom_call.1}
  #allocation0 [shape = 'u32[]', space=smem, size = 0x4, offset = 0x4, fixed_abs, tag = 'smem constant byte address 0x4 - core index']
  #allocation1 [shape = 'u32[144,128]{1,0:T(1,128)}', space=vmem, size = 0x12000, scoped, tag = 'internal scratch']
  #allocation2 [shape = 'f32[1,1]{1,0:T(1,128)S(6)}', space=smem, size = 0x200, scoped, tag = 'scoped memory for tpu_custom_call.1']
  %s0 = inlined_call_operand.hbm [shape: f32[32,512], index: 0, kind: input, shape index: {}]
  %s1 = inlined_call_operand.hbm [shape: bf16[512,256], index: 1, kind: input, shape index: {}]
  %s2 = inlined_call_operand.vmem [shape: f32[1,256], index: 2, kind: input, shape index: {}]
  %s3 = inlined_call_operand.<no memory space> [shape: f32[1,1], index: 3, kind: input, shape index: {}]
  %s4 = inlined_call_operand.hbm [shape: bf16[256,128], index: 4, kind: input, shape index: {}]
  %s5 = inlined_call_operand.vmem [shape: f32[1,128], index: 5, kind: input, shape index: {}]
  %s6 = inlined_call_operand.hbm [shape: bf16[32,128], index: 6, kind: output, shape index: {}]
  %s7 = sld [smem:[#allocation0]]
  $region69: #{tpu_custom_call.1} parent=0
    _
  %s9 = ssub.s32 1, %s7
  %s10 = scalar_select 0, %s9, %s7
  %11 = sst [smem:[#allocation2]] %s3
  $region1: #{tpu_custom_call.1} parent=0
    #allocation3 [shape = 'u8[32768]{0}', space=vmem, size = 0x8000, scoped, tag = 'input window, operand 0']
    #allocation4 [shape = 's32[2]{0}', space=sflag, size = 0x8, scoped, tag = 'scoped memory for tpu_custom_call.1']
    #allocation5 [shape = 's32[2]{0}', space=sflag, size = 0x8, scoped, tag = 'scoped memory for tpu_custom_call.1']
    #allocation6 [shape = 'u8[262144]{0}', space=vmem, size = 0x40000, scoped, tag = 'input window, operand 1, single buffered']
    #allocation7 [shape = 's32[1]{0}', space=sflag, size = 0x4, scoped, tag = 'scoped memory for tpu_custom_call.1']
    #allocation8 [shape = 'u8[65536]{0}', space=vmem, size = 0x10000, scoped, tag = 'input window, operand 4, single buffered']
    #allocation9 [shape = 'u8[4096]{0}', space=vmem, size = 0x1000, scoped, tag = 'output window, operand 0']
    %12 = vsyncpa [#allocation4], 0
    %s13 = scalar_lea.sflag [#allocation4], 1
    %14 = vsyncpa %s13, 0
    %15 = vsyncpa [#allocation7], 0
    %16 = vsyncpa [#allocation5], 0
    %s17 = scalar_lea.sflag [#allocation5], 1
    %18 = vsyncpa %s17, 0
    loop: start=0, step=1, limit=6
    $region2: #{tpu_custom_call.1} parent=1 // loop_pre_header
      _
    $region3: #{tpu_custom_call.1} parent=1 // loop_header
      %s20 = sphi 0, %s24
      %p21 = scmp.ge.s32.totalorder %s20, 6
      %s30 = sphi 0, %s32
      %s33 = sphi 0, %s30
      %s34 = sphi 0, %s33
      %s50 = sphi 0, %s34
      %s54 = sphi 0, %s54
      %s56 = sphi 0, %s54
      %s57 = sphi 0, %s56
      %s71 = sphi 0, %s57
      %s75 = sphi 0, %s75
      %s77 = sphi 0, %s75
      %s78 = sphi 0, %s77
      %s92 = sphi 0, %s78
      %s96 = sphi 0, %s96
      %s98 = sphi 0, %s96
      %s99 = sphi 0, %s98
      %s113 = sphi 0, %s99
      %s117 = sphi 0, %s117
      %s119 = sphi 0, %s117
      %s120 = sphi 0, %s119
      %s134 = sphi 0, %s120
      %s138 = sphi 0, %s138
      %s140 = sphi 0, %s138
      %s141 = sphi 0, %s140
      %s155 = sphi 0, %s141
      %s161 = sphi 0, %s163
      %s164 = sphi 0, %s161
      %s165 = sphi 0, %s164
      %s181 = sphi 0, %s165
    $region4: #{tpu_custom_call.1} parent=1 // loop_header_branch
      %23 = sbr.rel (%p21) target = $region8
    $region5: #{tpu_custom_call.1} parent=1 // loop_body
      %s25 = ssub.s32 %s20, 1
      %s26 = ssub.s32 %s20, 2
      %s27 = sadd.s32 %s20, 1
      %s28 = ssub.s32 %s20, %s27
      %p29 = scmp.eq.s32.totalorder %s28, 0
      %s31 = sadd.s32 %s30, 1
      %s32 = scalar_select %p29, %s30, %s31
      %p35 = pneg %p29
      %p36 = scmp.eq.s32.totalorder %s20, 3
      %p37 = por %p35, %p36
      %p38 = scmp.ne.s32.totalorder %s30, %s33
      %p39 = scmp.eq.s32.totalorder %s20, 0
      %p40 = por %p38, %p39
      %p41 = scmp.ne.s32.totalorder %s30, %s33
      %p42 = scmp.eq.s32.totalorder %s25, 3
      %p43 = por %p41, %p42
      %p44 = scmp.ne.s32.totalorder %s33, %s34
      %p45 = scmp.eq.s32.totalorder %s25, 0
      %p46 = por %p44, %p45
      %p47 = scmp.ne.s32.totalorder %s33, %s34
      %p48 = scmp.eq.s32.totalorder %s26, 3
      %p49 = por %p47, %p48
      %p51 = scmp.ne.s32.totalorder %s34, %s50
      %p52 = scmp.eq.s32.totalorder %s26, 0
      %p53 = por %p51, %p52
      %s55 = sadd.s32 %s54, 1
      %p58 = scmp.eq.s32.totalorder %s20, 3
      %p59 = scmp.ne.s32.totalorder %s54, %s56
      %p60 = scmp.eq.s32.totalorder %s20, 0
      %p61 = por %p59, %p60
      %p62 = scmp.ne.s32.totalorder %s54, %s56
      %p63 = scmp.eq.s32.totalorder %s25, 3
      %p64 = por %p62, %p63
      %p65 = scmp.ne.s32.totalorder %s56, %s57
      %p66 = scmp.eq.s32.totalorder %s25, 0
      %p67 = por %p65, %p66
      %p68 = scmp.ne.s32.totalorder %s56, %s57
      %p69 = scmp.eq.s32.totalorder %s26, 3
      %p70 = por %p68, %p69
      %p72 = scmp.ne.s32.totalorder %s57, %s71
      %p73 = scmp.eq.s32.totalorder %s26, 0
      %p74 = por %p72, %p73
      %s76 = sadd.s32 %s75, 1
      %p79 = scmp.eq.s32.totalorder %s20, 3
      %p80 = scmp.ne.s32.totalorder %s75, %s77
      %p81 = scmp.eq.s32.totalorder %s20, 0
      %p82 = por %p80, %p81
      %p83 = scmp.ne.s32.totalorder %s75, %s77
      %p84 = scmp.eq.s32.totalorder %s25, 3
      %p85 = por %p83, %p84
      %p86 = scmp.ne.s32.totalorder %s77, %s78
      %p87 = scmp.eq.s32.totalorder %s25, 0
      %p88 = por %p86, %p87
      %p89 = scmp.ne.s32.totalorder %s77, %s78
      %p90 = scmp.eq.s32.totalorder %s26, 3
      %p91 = por %p89, %p90
      %p93 = scmp.ne.s32.totalorder %s78, %s92
      %p94 = scmp.eq.s32.totalorder %s26, 0
      %p95 = por %p93, %p94
      %s97 = sadd.s32 %s96, 1
      %p100 = scmp.eq.s32.totalorder %s20, 3
      %p101 = scmp.ne.s32.totalorder %s96, %s98
      %p102 = scmp.eq.s32.totalorder %s20, 0
      %p103 = por %p101, %p102
      %p104 = scmp.ne.s32.totalorder %s96, %s98
      %p105 = scmp.eq.s32.totalorder %s25, 3
      %p106 = por %p104, %p105
      %p107 = scmp.ne.s32.totalorder %s98, %s99
      %p108 = scmp.eq.s32.totalorder %s25, 0
      %p109 = por %p107, %p108
      %p110 = scmp.ne.s32.totalorder %s98, %s99
      %p111 = scmp.eq.s32.totalorder %s26, 3
      %p112 = por %p110, %p111
      %p114 = scmp.ne.s32.totalorder %s99, %s113
      %p115 = scmp.eq.s32.totalorder %s26, 0
      %p116 = por %p114, %p115
      %s118 = sadd.s32 %s117, 1
      %p121 = scmp.eq.s32.totalorder %s20, 3
      %p122 = scmp.ne.s32.totalorder %s117, %s119
      %p123 = scmp.eq.s32.totalorder %s20, 0
      %p124 = por %p122, %p123
      %p125 = scmp.ne.s32.totalorder %s117, %s119
      %p126 = scmp.eq.s32.totalorder %s25, 3
      %p127 = por %p125, %p126
      %p128 = scmp.ne.s32.totalorder %s119, %s120
      %p129 = scmp.eq.s32.totalorder %s25, 0
      %p130 = por %p128, %p129
      %p131 = scmp.ne.s32.totalorder %s119, %s120
      %p132 = scmp.eq.s32.totalorder %s26, 3
      %p133 = por %p131, %p132
      %p135 = scmp.ne.s32.totalorder %s120, %s134
      %p136 = scmp.eq.s32.totalorder %s26, 0
      %p137 = por %p135, %p136
      %s139 = sadd.s32 %s138, 1
      %p142 = scmp.eq.s32.totalorder %s20, 3
      %p143 = scmp.ne.s32.totalorder %s138, %s140
      %p144 = scmp.eq.s32.totalorder %s20, 0
      %p145 = por %p143, %p144
      %p146 = scmp.ne.s32.totalorder %s138, %s140
      %p147 = scmp.eq.s32.totalorder %s25, 3
      %p148 = por %p146, %p147
      %p149 = scmp.ne.s32.totalorder %s140, %s141
      %p150 = scmp.eq.s32.totalorder %s25, 0
      %p151 = por %p149, %p150
      %p152 = scmp.ne.s32.totalorder %s140, %s141
      %p153 = scmp.eq.s32.totalorder %s26, 3
      %p154 = por %p152, %p153
      %p156 = scmp.ne.s32.totalorder %s141, %s155
      %p157 = scmp.eq.s32.totalorder %s26, 0
      %p158 = por %p156, %p157
      %s159 = ssub.s32 %s20, %s27
      %p160 = scmp.eq.s32.totalorder %s159, 0
      %s162 = sadd.s32 %s161, 1
      %s163 = scalar_select %p160, %s161, %s162
      %p166 = pneg %p160
      %p167 = scmp.eq.s32.totalorder %s20, 3
      %p168 = por %p166, %p167
      %p169 = scmp.ne.s32.totalorder %s161, %s164
      %p170 = scmp.eq.s32.totalorder %s20, 0
      %p171 = por %p169, %p170
      %p172 = scmp.ne.s32.totalorder %s161, %s164
      %p173 = scmp.eq.s32.totalorder %s25, 3
      %p174 = por %p172, %p173
      %p175 = scmp.ne.s32.totalorder %s164, %s165
      %p176 = scmp.eq.s32.totalorder %s25, 0
      %p177 = por %p175, %p176
      %p178 = scmp.ne.s32.totalorder %s164, %s165
      %p179 = scmp.eq.s32.totalorder %s26, 3
      %p180 = por %p178, %p179
      %p182 = scmp.ne.s32.totalorder %s165, %s181
      %p183 = scmp.eq.s32.totalorder %s26, 0
      %p184 = por %p182, %p183
      %p185 = scmp.le.s32.totalorder 1, %s20
      %p186 = scmp.lt.s32.totalorder %s20, 5
      %p187 = pnand %p185, %p186
      %p188 = pneg %p187
      // Predicated region
      $region9: #{tpu_custom_call.1} parent=5 // pred_check
        _
      $region10: #{tpu_custom_call.1} parent=5 // pred_check_branch
        %190 = sbr.rel (%p187) target = $region12
      $region11: #{tpu_custom_call.1} parent=5 // pred_region
        %s191 = ssub.s32 %s20, 1
        // Predicated region
        $region13: #{tpu_custom_call.1} parent=11 // pred_check
          %p192 = pneg %p67
        $region14: #{tpu_custom_call.1} parent=11 // pred_check_branch
          %194 = sbr.rel (%p192) target = $region16
        $region15: #{tpu_custom_call.1} parent=11 // pred_region
          %s196 = ssub.s32 8192, 8192
          %197 = vsyncadd [#allocation7], %s196
          %s198 = sshll.u32 [#allocation6], 4
          %s199 = int_to_ptr.vmem [resolvable:$true] %s198
          %204 = dma.hbm_to_vmem [thread:$0]  %s1, 8192, %s199, [#allocation7], 128, 128, 8
        $region16: #{tpu_custom_call.1} parent=11 // pred_fallthru
          _
        // Predicated region
        $region17: #{tpu_custom_call.1} parent=11 // pred_check
          %p205 = pneg %p88
        $region18: #{tpu_custom_call.1} parent=11 // pred_check_branch
          %207 = sbr.rel (%p205) target = $region20
        $region19: #{tpu_custom_call.1} parent=11 // pred_region
          _
        $region20: #{tpu_custom_call.1} parent=11 // pred_fallthru
          _
        // Predicated region
        $region21: #{tpu_custom_call.1} parent=11 // pred_check
          %p208 = pneg %p109
        $region22: #{tpu_custom_call.1} parent=11 // pred_check_branch
          %210 = sbr.rel (%p208) target = $region24
        $region23: #{tpu_custom_call.1} parent=11 // pred_region
          _
        $region24: #{tpu_custom_call.1} parent=11 // pred_fallthru
          _
        // Predicated region
        $region25: #{tpu_custom_call.1} parent=11 // pred_check
          %p211 = pneg %p130
        $region26: #{tpu_custom_call.1} parent=11 // pred_check_branch
          %213 = sbr.rel (%p211) target = $region28
        $region27: #{tpu_custom_call.1} parent=11 // pred_region
          %s215 = ssub.s32 2048, 2048
          %216 = vsyncadd [#allocation7], %s215
          %s217 = sshll.u32 [#allocation8], 4
          %s218 = int_to_ptr.vmem [resolvable:$true] %s217
          %223 = dma.hbm_to_vmem [thread:$0]  %s4, 2048, %s218, [#allocation7], 64, 64, 4
        $region28: #{tpu_custom_call.1} parent=11 // pred_fallthru
          _
        // Predicated region
        $region29: #{tpu_custom_call.1} parent=11 // pred_check
          %p224 = pneg %p151
        $region30: #{tpu_custom_call.1} parent=11 // pred_check_branch
          %226 = sbr.rel (%p224) target = $region32
        $region31: #{tpu_custom_call.1} parent=11 // pred_region
          _
        $region32: #{tpu_custom_call.1} parent=11 // pred_fallthru
          _
      $region12: #{tpu_custom_call.1} parent=5 // pred_fallthru
        _
      %p227 = scmp.lt.s32.totalorder %s20, 4
      // Predicated region
      $region33: #{tpu_custom_call.1} parent=5 // pred_check
        %p228 = pneg %p227
      $region34: #{tpu_custom_call.1} parent=5 // pred_check_branch
        %230 = sbr.rel (%p228) target = $region36
      $region35: #{tpu_custom_call.1} parent=5 // pred_region
        // Predicated region
        $region37: #{tpu_custom_call.1} parent=35 // pred_check
          %p231 = pneg %p40
        $region38: #{tpu_custom_call.1} parent=35 // pred_check_branch
          %233 = sbr.rel (%p231) target = $region40
        $region39: #{tpu_custom_call.1} parent=35 // pred_region
          %s234 = sand.u32 %s30, 1
          %s235 = scalar_lea.sflag [#allocation4], %s234
          %s236 = sand.u32 %s30, 1
          %s237 = smul.addr %s236, 32
          %s238 = scalar_lea.vmem [#allocation3], %s237
          %s240 = ssub.s32 512, 512
          %241 = vsyncadd %s235, %s240
          %s242 = smul.addr %s20, 4
          %s243 = smul.addr %s242, 128
          %s244 = scalar_lea.hbm %s0, %s243
          %s246 = sshll.u32 %s238, 4
          %s247 = int_to_ptr.vmem [resolvable:$true] %s246
          %249 = dma.hbm_to_vmem [thread:$0]  %s244, 512, %s247, %s235
        $region40: #{tpu_custom_call.1} parent=35 // pred_fallthru
          _
      $region36: #{tpu_custom_call.1} parent=5 // pred_fallthru
        _
      %p250 = scmp.le.s32.totalorder 1, %s20
      %p251 = scmp.lt.s32.totalorder %s20, 5
      %p252 = pnand %p250, %p251
      %p253 = pneg %p252
      // Predicated region
      $region41: #{tpu_custom_call.1} parent=5 // pred_check
        _
      $region42: #{tpu_custom_call.1} parent=5 // pred_check_branch
        %255 = sbr.rel (%p252) target = $region44
      $region43: #{tpu_custom_call.1} parent=5 // pred_region
        %s256 = ssub.s32 %s20, 1
        %s257 = sand.u32 %s33, 1
        %s258 = scalar_lea.sflag [#allocation4], %s257
        %s259 = sand.u32 %s33, 1
        %s260 = smul.addr %s259, 32
        %s261 = scalar_lea.vmem [#allocation3], %s260
        // Predicated region
        $region45: #{tpu_custom_call.1} parent=43 // pred_check
          %p262 = pneg %p46
        $region46: #{tpu_custom_call.1} parent=43 // pred_check_branch
          %264 = sbr.rel (%p262) target = $region48
        $region47: #{tpu_custom_call.1} parent=43 // pred_region
          %265 = dma.done %s258, 512
        $region48: #{tpu_custom_call.1} parent=43 // pred_fallthru
          _
        // Predicated region
        $region49: #{tpu_custom_call.1} parent=43 // pred_check
          %p266 = pneg %p67
        $region50: #{tpu_custom_call.1} parent=43 // pred_check_branch
          %268 = sbr.rel (%p266) target = $region52
        $region51: #{tpu_custom_call.1} parent=43 // pred_region
          %269 = dma.done [#allocation7], 8192
        $region52: #{tpu_custom_call.1} parent=43 // pred_fallthru
          _
        // Predicated region
        $region53: #{tpu_custom_call.1} parent=43 // pred_check
          %p270 = pneg %p130
        $region54: #{tpu_custom_call.1} parent=43 // pred_check_branch
          %272 = sbr.rel (%p270) target = $region56
        $region55: #{tpu_custom_call.1} parent=43 // pred_region
          %273 = dma.done [#allocation7], 2048
        $region56: #{tpu_custom_call.1} parent=43 // pred_fallthru
          _
        %s274 = sand.u32 %s33, 1
        %s275 = scalar_lea.sflag [#allocation4], %s274
        %s276 = sand.u32 %s33, 1
        %s277 = smul.addr %s276, 32
        %s278 = scalar_lea.vmem [#allocation3], %s277
        %p279 = pneg %p46
        %p280 = pneg %p43
        %p281 = pneg %p67
        %p282 = pneg %p64
        %p283 = pneg %p88
        %p284 = pneg %p85
        %p285 = pneg %p109
        %p286 = pneg %p106
        %p287 = pneg %p130
        %p288 = pneg %p127
        %p289 = pneg %p151
        %p290 = pneg %p148
        %p291 = pneg %p177
        %p292 = pneg %p174
        %s293 = sand.u32 %s164, 1
        %s294 = scalar_lea.sflag [#allocation5], %s293
        %s295 = sand.u32 %s164, 1
        %s296 = smul.addr %s295, 4
        %s297 = scalar_lea.vmem [#allocation9], %s296
        %v299 = vld [vmem:[%s261] sm:$0xff]
        %v300 = vld [vmem:[%s261 + $0x8] sm:$0xff]
        %v301 = vld [vmem:[%s261 + $0x10] sm:$0xff]
        %v302 = vld [vmem:[%s261 + $0x18] sm:$0xff]
        %v303 = vpack.c.bf16 %v299, %v299
        %v304 = vpack.c.bf16 %v300, %v300
        %v305 = vpack.c.bf16 %v301, %v301
        %v306 = vpack.c.bf16 %v302, %v302
        %v307 = vld [vmem:[#allocation6] sm:$0xff]
        %v308 = vld [vmem:[#allocation6 + $0x8] sm:$0xff]
        %v309 = vld [vmem:[#allocation6 + $0x10] sm:$0xff]
        %v310 = vld [vmem:[#allocation6 + $0x18] sm:$0xff]
        %v311 = vld [vmem:[#allocation6 + $0x20] sm:$0xff]
        %v312 = vld [vmem:[#allocation6 + $0x28] sm:$0xff]
        %v313 = vld [vmem:[#allocation6 + $0x30] sm:$0xff]
        %v314 = vld [vmem:[#allocation6 + $0x38] sm:$0xff]
        %v315 = vld [vmem:[#allocation6 + $0x40] sm:$0xff]
        %v316 = vld [vmem:[#allocation6 + $0x48] sm:$0xff]
        %v317 = vld [vmem:[#allocation6 + $0x50] sm:$0xff]
        %v318 = vld [vmem:[#allocation6 + $0x58] sm:$0xff]
        %v319 = vld [vmem:[#allocation6 + $0x60] sm:$0xff]
        %v320 = vld [vmem:[#allocation6 + $0x68] sm:$0xff]
        %v321 = vld [vmem:[#allocation6 + $0x70] sm:$0xff]
        %v322 = vld [vmem:[#allocation6 + $0x78] sm:$0xff]
        %v323 = vld [vmem:[#allocation6 + $0x80] sm:$0xff]
        %v324 = vld [vmem:[#allocation6 + $0x88] sm:$0xff]
        %v325 = vld [vmem:[#allocation6 + $0x90] sm:$0xff]
        %v326 = vld [vmem:[#allocation6 + $0x98] sm:$0xff]
        %v327 = vld [vmem:[#allocation6 + $0xa0] sm:$0xff]
        %v328 = vld [vmem:[#allocation6 + $0xa8] sm:$0xff]
        %v329 = vld [vmem:[#allocation6 + $0xb0] sm:$0xff]
        %v330 = vld [vmem:[#allocation6 + $0xb8] sm:$0xff]
        %v331 = vld [vmem:[#allocation6 + $0xc0] sm:$0xff]
        %v332 = vld [vmem:[#allocation6 + $0xc8] sm:$0xff]
        %v333 = vld [vmem:[#allocation6 + $0xd0] sm:$0xff]
        %v334 = vld [vmem:[#allocation6 + $0xd8] sm:$0xff]
        %v335 = vld [vmem:[#allocation6 + $0xe0] sm:$0xff]
        %v336 = vld [vmem:[#allocation6 + $0xe8] sm:$0xff]
        %v337 = vld [vmem:[#allocation6 + $0xf0] sm:$0xff]
        %v338 = vld [vmem:[#allocation6 + $0xf8] sm:$0xff]
        %v339 = vld [vmem:[#allocation6 + $0x100] sm:$0xff]
        %v340 = vld [vmem:[#allocation6 + $0x108] sm:$0xff]
        %v341 = vld [vmem:[#allocation6 + $0x110] sm:$0xff]
        %v342 = vld [vmem:[#allocation6 + $0x118] sm:$0xff]
        %v343 = vld [vmem:[#allocation6 + $0x120] sm:$0xff]
        %v344 = vld [vmem:[#allocation6 + $0x128] sm:$0xff]
        %v345 = vld [vmem:[#allocation6 + $0x130] sm:$0xff]
        %v346 = vld [vmem:[#allocation6 + $0x138] sm:$0xff]
        %v347 = vld [vmem:[#allocation6 + $0x140] sm:$0xff]
        %v348 = vld [vmem:[#allocation6 + $0x148] sm:$0xff]
        %v349 = vld [vmem:[#allocation6 + $0x150] sm:$0xff]
        %v350 = vld [vmem:[#allocation6 + $0x158] sm:$0xff]
        %v351 = vld [vmem:[#allocation6 + $0x160] sm:$0xff]
        %v352 = vld [vmem:[#allocation6 + $0x168] sm:$0xff]
        %v353 = vld [vmem:[#allocation6 + $0x170] sm:$0xff]
        %v354 = vld [vmem:[#allocation6 + $0x178] sm:$0xff]
        %v355 = vld [vmem:[#allocation6 + $0x180] sm:$0xff]
        %v356 = vld [vmem:[#allocation6 + $0x188] sm:$0xff]
        %v357 = vld [vmem:[#allocation6 + $0x190] sm:$0xff]
        %v358 = vld [vmem:[#allocation6 + $0x198] sm:$0xff]
        %v359 = vld [vmem:[#allocation6 + $0x1a0] sm:$0xff]
        %v360 = vld [vmem:[#allocation6 + $0x1a8] sm:$0xff]
        %v361 = vld [vmem:[#allocation6 + $0x1b0] sm:$0xff]
        %v362 = vld [vmem:[#allocation6 + $0x1b8] sm:$0xff]
        %v363 = vld [vmem:[#allocation6 + $0x1c0] sm:$0xff]
        %v364 = vld [vmem:[#allocation6 + $0x1c8] sm:$0xff]
        %v365 = vld [vmem:[#allocation6 + $0x1d0] sm:$0xff]
        %v366 = vld [vmem:[#allocation6 + $0x1d8] sm:$0xff]
        %v367 = vld [vmem:[#allocation6 + $0x1e0] sm:$0xff]
        %v368 = vld [vmem:[#allocation6 + $0x1e8] sm:$0xff]
        %v369 = vld [vmem:[#allocation6 + $0x1f0] sm:$0xff]
        %v370 = vld [vmem:[#allocation6 + $0x1f8] sm:$0xff]
        %v371 = vld [vmem:[%s2] sm:$0x3]
        %v373 = vlaneseq
        %v374 = vshrl.u32 %v373, 7
        %v375 = vsub.s32 0, %v374
        %v376 = vrot.slane %v371, %v375
        %v377 = vlaneseq
        %v378 = vshrl.u32 %v377, 7
        %v379 = vsub.s32 1, %v378
        %v380 = vrot.slane %v371, %v379
        %v447 = vunpack.c.l.b16 %v307
        %v448 = vunpack.c.h.b16 %v307
        %v449 = vunpack.c.l.b16 %v308
        %v450 = vunpack.c.h.b16 %v308
        %v451 = vunpack.c.l.b16 %v309
        %v452 = vunpack.c.h.b16 %v309
        %v453 = vunpack.c.l.b16 %v310
        %v454 = vunpack.c.h.b16 %v310
        %v455 = vunpack.c.l.b16 %v311
        %v456 = vunpack.c.h.b16 %v311
        %v457 = vunpack.c.l.b16 %v312
        %v458 = vunpack.c.h.b16 %v312
        %v459 = vunpack.c.l.b16 %v313
        %v460 = vunpack.c.h.b16 %v313
        %v461 = vunpack.c.l.b16 %v314
        %v462 = vunpack.c.h.b16 %v314
        %v463 = vunpack.c.l.b16 %v315
        %v464 = vunpack.c.h.b16 %v315
        %v465 = vunpack.c.l.b16 %v316
        %v466 = vunpack.c.h.b16 %v316
        %v467 = vunpack.c.l.b16 %v317
        %v468 = vunpack.c.h.b16 %v317
        %v469 = vunpack.c.l.b16 %v318
        %v470 = vunpack.c.h.b16 %v318
        %v471 = vunpack.c.l.b16 %v319
        %v472 = vunpack.c.h.b16 %v319
        %v473 = vunpack.c.l.b16 %v320
        %v474 = vunpack.c.h.b16 %v320
        %v475 = vunpack.c.l.b16 %v321
        %v476 = vunpack.c.h.b16 %v321
        %v477 = vunpack.c.l.b16 %v322
        %v478 = vunpack.c.h.b16 %v322
        %v479 = vunpack.c.l.b16 %v323
        %v480 = vunpack.c.h.b16 %v323
        %v481 = vunpack.c.l.b16 %v324
        %v482 = vunpack.c.h.b16 %v324
        %v483 = vunpack.c.l.b16 %v325
        %v484 = vunpack.c.h.b16 %v325
        %v485 = vunpack.c.l.b16 %v326
        %v486 = vunpack.c.h.b16 %v326
        %v487 = vunpack.c.l.b16 %v327
        %v488 = vunpack.c.h.b16 %v327
        %v489 = vunpack.c.l.b16 %v328
        %v490 = vunpack.c.h.b16 %v328
        %v491 = vunpack.c.l.b16 %v329
        %v492 = vunpack.c.h.b16 %v329
        %v493 = vunpack.c.l.b16 %v330
        %v494 = vunpack.c.h.b16 %v330
        %v495 = vunpack.c.l.b16 %v331
        %v496 = vunpack.c.h.b16 %v331
        %v497 = vunpack.c.l.b16 %v332
        %v498 = vunpack.c.h.b16 %v332
        %v499 = vunpack.c.l.b16 %v333
        %v500 = vunpack.c.h.b16 %v333
        %v501 = vunpack.c.l.b16 %v334
        %v502 = vunpack.c.h.b16 %v334
        %v503 = vunpack.c.l.b16 %v335
        %v504 = vunpack.c.h.b16 %v335
        %v505 = vunpack.c.l.b16 %v336
        %v506 = vunpack.c.h.b16 %v336
        %v507 = vunpack.c.l.b16 %v337
        %v508 = vunpack.c.h.b16 %v337
        %v509 = vunpack.c.l.b16 %v338
        %v510 = vunpack.c.h.b16 %v338
        %v511 = vunpack.c.l.b16 %v339
        %v512 = vunpack.c.h.b16 %v339
        %v513 = vunpack.c.l.b16 %v340
        %v514 = vunpack.c.h.b16 %v340
        %v515 = vunpack.c.l.b16 %v341
        %v516 = vunpack.c.h.b16 %v341
        %v517 = vunpack.c.l.b16 %v342
        %v518 = vunpack.c.h.b16 %v342
        %v519 = vunpack.c.l.b16 %v343
        %v520 = vunpack.c.h.b16 %v343
        %v521 = vunpack.c.l.b16 %v344
        %v522 = vunpack.c.h.b16 %v344
        %v523 = vunpack.c.l.b16 %v345
        %v524 = vunpack.c.h.b16 %v345
        %v525 = vunpack.c.l.b16 %v346
        %v526 = vunpack.c.h.b16 %v346
        %v527 = vunpack.c.l.b16 %v347
        %v528 = vunpack.c.h.b16 %v347
        %v529 = vunpack.c.l.b16 %v348
        %v530 = vunpack.c.h.b16 %v348
        %v531 = vunpack.c.l.b16 %v349
        %v532 = vunpack.c.h.b16 %v349
        %v533 = vunpack.c.l.b16 %v350
        %v534 = vunpack.c.h.b16 %v350
        %v535 = vunpack.c.l.b16 %v351
        %v536 = vunpack.c.h.b16 %v351
        %v537 = vunpack.c.l.b16 %v352
        %v538 = vunpack.c.h.b16 %v352
        %v539 = vunpack.c.l.b16 %v353
        %v540 = vunpack.c.h.b16 %v353
        %v541 = vunpack.c.l.b16 %v354
        %v542 = vunpack.c.h.b16 %v354
        %v543 = vunpack.c.l.b16 %v355
        %v544 = vunpack.c.h.b16 %v355
        %v545 = vunpack.c.l.b16 %v356
        %v546 = vunpack.c.h.b16 %v356
        %v547 = vunpack.c.l.b16 %v357
        %v548 = vunpack.c.h.b16 %v357
        %v549 = vunpack.c.l.b16 %v358
        %v550 = vunpack.c.h.b16 %v358
        %v551 = vunpack.c.l.b16 %v359
        %v552 = vunpack.c.h.b16 %v359
        %v553 = vunpack.c.l.b16 %v360
        %v554 = vunpack.c.h.b16 %v360
        %v555 = vunpack.c.l.b16 %v361
        %v556 = vunpack.c.h.b16 %v361
        %v557 = vunpack.c.l.b16 %v362
        %v558 = vunpack.c.h.b16 %v362
        %v559 = vunpack.c.l.b16 %v363
        %v560 = vunpack.c.h.b16 %v363
        %v561 = vunpack.c.l.b16 %v364
        %v562 = vunpack.c.h.b16 %v364
        %v563 = vunpack.c.l.b16 %v365
        %v564 = vunpack.c.h.b16 %v365
        %v565 = vunpack.c.l.b16 %v366
        %v566 = vunpack.c.h.b16 %v366
        %v567 = vunpack.c.l.b16 %v367
        %v568 = vunpack.c.h.b16 %v367
        %v569 = vunpack.c.l.b16 %v368
        %v570 = vunpack.c.h.b16 %v368
        %v571 = vunpack.c.l.b16 %v369
        %v572 = vunpack.c.h.b16 %v369
        %v573 = vunpack.c.l.b16 %v370
        %v574 = vunpack.c.h.b16 %v370
        %v575 = vpack.c.b16 %v449, %v447
        %v576 = vpack.c.b16 %v450, %v448
        %v577 = vpack.c.b16 %v453, %v451
        %v578 = vpack.c.b16 %v454, %v452
        %v579 = vpack.c.b16 %v457, %v455
        %v580 = vpack.c.b16 %v458, %v456
        %v581 = vpack.c.b16 %v461, %v459
        %v582 = vpack.c.b16 %v462, %v460
        %v583 = vpack.c.b16 %v465, %v463
        %v584 = vpack.c.b16 %v466, %v464
        %v585 = vpack.c.b16 %v469, %v467
        %v586 = vpack.c.b16 %v470, %v468
        %v587 = vpack.c.b16 %v473, %v471
        %v588 = vpack.c.b16 %v474, %v472
        %v589 = vpack.c.b16 %v477, %v475
        %v590 = vpack.c.b16 %v478, %v476
        %v591 = vpack.c.b16 %v481, %v479
        %v592 = vpack.c.b16 %v482, %v480
        %v593 = vpack.c.b16 %v485, %v483
        %v594 = vpack.c.b16 %v486, %v484
        %v595 = vpack.c.b16 %v489, %v487
        %v596 = vpack.c.b16 %v490, %v488
        %v597 = vpack.c.b16 %v493, %v491
        %v598 = vpack.c.b16 %v494, %v492
        %v599 = vpack.c.b16 %v497, %v495
        %v600 = vpack.c.b16 %v498, %v496
        %v601 = vpack.c.b16 %v501, %v499
        %v602 = vpack.c.b16 %v502, %v500
        %v603 = vpack.c.b16 %v505, %v503
        %v604 = vpack.c.b16 %v506, %v504
        %v605 = vpack.c.b16 %v509, %v507
        %v606 = vpack.c.b16 %v510, %v508
        %v607 = vpack.c.b16 %v513, %v511
        %v608 = vpack.c.b16 %v514, %v512
        %v609 = vpack.c.b16 %v517, %v515
        %v610 = vpack.c.b16 %v518, %v516
        %v611 = vpack.c.b16 %v521, %v519
        %v612 = vpack.c.b16 %v522, %v520
        %v613 = vpack.c.b16 %v525, %v523
        %v614 = vpack.c.b16 %v526, %v524
        %v615 = vpack.c.b16 %v529, %v527
        %v616 = vpack.c.b16 %v530, %v528
        %v617 = vpack.c.b16 %v533, %v531
        %v618 = vpack.c.b16 %v534, %v532
        %v619 = vpack.c.b16 %v537, %v535
        %v620 = vpack.c.b16 %v538, %v536
        %v621 = vpack.c.b16 %v541, %v539
        %v622 = vpack.c.b16 %v542, %v540
        %v623 = vpack.c.b16 %v545, %v543
        %v624 = vpack.c.b16 %v546, %v544
        %v625 = vpack.c.b16 %v549, %v547
        %v626 = vpack.c.b16 %v550, %v548
        %v627 = vpack.c.b16 %v553, %v551
        %v628 = vpack.c.b16 %v554, %v552
        %v629 = vpack.c.b16 %v557, %v555
        %v630 = vpack.c.b16 %v558, %v556
        %v631 = vpack.c.b16 %v561, %v559
        %v632 = vpack.c.b16 %v562, %v560
        %v633 = vpack.c.b16 %v565, %v563
        %v634 = vpack.c.b16 %v566, %v564
        %v635 = vpack.c.b16 %v569, %v567
        %v636 = vpack.c.b16 %v570, %v568
        %v637 = vpack.c.b16 %v573, %v571
        %v638 = vpack.c.b16 %v574, %v572
        %703 = vmatprep.subr.bf16.mxu0 %v576
        %704 = vmatpush1.bf16.msra.mxu0 %v575
        %705 = vmatprep.subr.bf16.mxu0 %v578
        %706 = vmatpush1.bf16.msra.mxu0 %v577
        %707 = vmatprep.subr.bf16.mxu0 %v580
        %708 = vmatpush1.bf16.msra.mxu0 %v579
        %709 = vmatprep.subr.bf16.mxu0 %v582
        %710 = vmatpush1.bf16.msra.mxu0 %v581
        %711 = vmatprep.subr.bf16.mxu0 %v584
        %712 = vmatpush1.bf16.msra.mxu0 %v583
        %713 = vmatprep.subr.bf16.mxu0 %v586
        %714 = vmatpush1.bf16.msra.mxu0 %v585
        %715 = vmatprep.subr.bf16.mxu0 %v588
        %716 = vmatpush1.bf16.msra.mxu0 %v587
        %717 = vmatprep.subr.bf16.mxu0 %v590
        %718 = vmatpush1.bf16.msra.mxu0 %v589
        %719 = vmatprep.subr.bf16.mxu0 %v592
        %720 = vmatpush1.bf16.msra.mxu0 %v591
        %721 = vmatprep.subr.bf16.mxu0 %v594
        %722 = vmatpush1.bf16.msra.mxu0 %v593
        %723 = vmatprep.subr.bf16.mxu0 %v596
        %724 = vmatpush1.bf16.msra.mxu0 %v595
        %725 = vmatprep.subr.bf16.mxu0 %v598
        %726 = vmatpush1.bf16.msra.mxu0 %v597
        %727 = vmatprep.subr.bf16.mxu0 %v600
        %728 = vmatpush1.bf16.msra.mxu0 %v599
        %729 = vmatprep.subr.bf16.mxu0 %v602
        %730 = vmatpush1.bf16.msra.mxu0 %v601
        %731 = vmatprep.subr.bf16.mxu0 %v604
        %732 = vmatpush1.bf16.msra.mxu0 %v603
        %733 = vmatprep.subr.bf16.mxu0 %v606
        %734 = vmatpush1.bf16.msra.mxu0 %v605
        %735 = vmatprep.mubr.bf16.mxu0 %v304
        %736 = vmatmul.mubr.bf16.gmra.mrb[0].mxu0 %v303
        %v737 = vpop.f32.mrb[0].mxu0
        %v738 = vadd.f32 %v376, %v737
        %v739 = vpop.f32.mrb[0].mxu0
        %v740 = vadd.f32 %v380, %v739
        %v741 = vpop.f32.mrb[0].mxu0
        %v742 = vpop.f32.mrb[0].mxu0
        %743 = vdwg.mxu0
        %744 = vmatprep.subr.bf16.mxu0 %v608
        %745 = vmatpush1.bf16.msra.mxu0 %v607
        %746 = vmatprep.subr.bf16.mxu0 %v610
        %747 = vmatpush1.bf16.msra.mxu0 %v609
        %748 = vmatprep.subr.bf16.mxu0 %v612
        %749 = vmatpush1.bf16.msra.mxu0 %v611
        %750 = vmatprep.subr.bf16.mxu0 %v614
        %751 = vmatpush1.bf16.msra.mxu0 %v613
        %752 = vmatprep.subr.bf16.mxu0 %v616
        %753 = vmatpush1.bf16.msra.mxu0 %v615
        %754 = vmatprep.subr.bf16.mxu0 %v618
        %755 = vmatpush1.bf16.msra.mxu0 %v617
        %756 = vmatprep.subr.bf16.mxu0 %v620
        %757 = vmatpush1.bf16.msra.mxu0 %v619
        %758 = vmatprep.subr.bf16.mxu0 %v622
        %759 = vmatpush1.bf16.msra.mxu0 %v621
        %760 = vmatprep.subr.bf16.mxu0 %v624
        %761 = vmatpush1.bf16.msra.mxu0 %v623
        %762 = vmatprep.subr.bf16.mxu0 %v626
        %763 = vmatpush1.bf16.msra.mxu0 %v625
        %764 = vmatprep.subr.bf16.mxu0 %v628
        %765 = vmatpush1.bf16.msra.mxu0 %v627
        %766 = vmatprep.subr.bf16.mxu0 %v630
        %767 = vmatpush1.bf16.msra.mxu0 %v629
        %768 = vmatprep.subr.bf16.mxu0 %v632
        %769 = vmatpush1.bf16.msra.mxu0 %v631
        %770 = vmatprep.subr.bf16.mxu0 %v634
        %771 = vmatpush1.bf16.msra.mxu0 %v633
        %772 = vmatprep.subr.bf16.mxu0 %v636
        %773 = vmatpush1.bf16.msra.mxu0 %v635
        %774 = vmatprep.subr.bf16.mxu0 %v638
        %775 = vmatpush1.bf16.msra.mxu0 %v637
        %776 = vmatprep.mubr.bf16.mxu0 %v306
        %777 = vmatmul.mubr.bf16.gmra.mrb[0].mxu0 %v305
        %v778 = vpop.f32.mrb[0].mxu0
        %v779 = vadd.f32 %v738, %v778
        %v780 = vpop.f32.mrb[0].mxu0
        %v781 = vadd.f32 %v740, %v780
        %v782 = vpop.f32.mrb[0].mxu0
        %v783 = vpop.f32.mrb[0].mxu0
        %784 = vdwg.mxu0
        %s785 = sld [smem:[#allocation2]]
        %vm786 = vcmp.ge.f32.partialorder %v779, 0.0
        %vm787 = vcmp.ge.f32.partialorder %v781, 0.0
        %v788 = vstv %s785
        %v789 = vmul.f32 %v788, %v779
        %v790 = vmul.f32 %v788, %v781
        %v791 = vsel %vm786, %v779, %v789
        %v792 = vsel %vm787, %v781, %v790
        %v793 = vpack.c.bf16 %v791, %v791
        %v794 = vpack.c.bf16 %v792, %v792
        %v795 = vld [vmem:[#allocation8] sm:$0xf]
        %v796 = vld [vmem:[#allocation8 + $0x4] sm:$0xf]
        %v797 = vld [vmem:[#allocation8 + $0x8] sm:$0xf]
        %v798 = vld [vmem:[#allocation8 + $0xc] sm:$0xf]
        %v799 = vld [vmem:[#allocation8 + $0x10] sm:$0xf]
        %v800 = vld [vmem:[#allocation8 + $0x14] sm:$0xf]
        %v801 = vld [vmem:[#allocation8 + $0x18] sm:$0xf]
        %v802 = vld [vmem:[#allocation8 + $0x1c] sm:$0xf]
        %v803 = vld [vmem:[#allocation8 + $0x20] sm:$0xf]
        %v804 = vld [vmem:[#allocation8 + $0x24] sm:$0xf]
        %v805 = vld [vmem:[#allocation8 + $0x28] sm:$0xf]
        %v806 = vld [vmem:[#allocation8 + $0x2c] sm:$0xf]
        %v807 = vld [vmem:[#allocation8 + $0x30] sm:$0xf]
        %v808 = vld [vmem:[#allocation8 + $0x34] sm:$0xf]
        %v809 = vld [vmem:[#allocation8 + $0x38] sm:$0xf]
        %v810 = vld [vmem:[#allocation8 + $0x3c] sm:$0xf]
        %v811 = vld [vmem:[#allocation8 + $0x40] sm:$0xf]
        %v812 = vld [vmem:[#allocation8 + $0x44] sm:$0xf]
        %v813 = vld [vmem:[#allocation8 + $0x48] sm:$0xf]
        %v814 = vld [vmem:[#allocation8 + $0x4c] sm:$0xf]
        %v815 = vld [vmem:[#allocation8 + $0x50] sm:$0xf]
        %v816 = vld [vmem:[#allocation8 + $0x54] sm:$0xf]
        %v817 = vld [vmem:[#allocation8 + $0x58] sm:$0xf]
        %v818 = vld [vmem:[#allocation8 + $0x5c] sm:$0xf]
        %v819 = vld [vmem:[#allocation8 + $0x60] sm:$0xf]
        %v820 = vld [vmem:[#allocation8 + $0x64] sm:$0xf]
        %v821 = vld [vmem:[#allocation8 + $0x68] sm:$0xf]
        %v822 = vld [vmem:[#allocation8 + $0x6c] sm:$0xf]
        %v823 = vld [vmem:[#allocation8 + $0x70] sm:$0xf]
        %v824 = vld [vmem:[#allocation8 + $0x74] sm:$0xf]
        %v825 = vld [vmem:[#allocation8 + $0x78] sm:$0xf]
        %v826 = vld [vmem:[#allocation8 + $0x7c] sm:$0xf]
        %v827 = vld [vmem:[%s5] sm:$0x1]
        %v829 = vlaneseq
        %v830 = vshrl.u32 %v829, 7
        %v831 = vsub.s32 0, %v830
        %v832 = vrot.slane %v827, %v831
        %v866 = vunpack.c.l.b16 %v795
        %v867 = vunpack.c.l.b16 %v796
        %v868 = vunpack.c.l.b16 %v797
        %v869 = vunpack.c.l.b16 %v798
        %v870 = vunpack.c.l.b16 %v799
        %v871 = vunpack.c.l.b16 %v800
        %v872 = vunpack.c.l.b16 %v801
        %v873 = vunpack.c.l.b16 %v802
        %v874 = vunpack.c.l.b16 %v803
        %v875 = vunpack.c.l.b16 %v804
        %v876 = vunpack.c.l.b16 %v805
        %v877 = vunpack.c.l.b16 %v806
        %v878 = vunpack.c.l.b16 %v807
        %v879 = vunpack.c.l.b16 %v808
        %v880 = vunpack.c.l.b16 %v809
        %v881 = vunpack.c.l.b16 %v810
        %v882 = vunpack.c.l.b16 %v811
        %v883 = vunpack.c.l.b16 %v812
        %v884 = vunpack.c.l.b16 %v813
        %v885 = vunpack.c.l.b16 %v814
        %v886 = vunpack.c.l.b16 %v815
        %v887 = vunpack.c.l.b16 %v816
        %v888 = vunpack.c.l.b16 %v817
        %v889 = vunpack.c.l.b16 %v818
        %v890 = vunpack.c.l.b16 %v819
        %v891 = vunpack.c.l.b16 %v820
        %v892 = vunpack.c.l.b16 %v821
        %v893 = vunpack.c.l.b16 %v822
        %v894 = vunpack.c.l.b16 %v823
        %v895 = vunpack.c.l.b16 %v824
        %v896 = vunpack.c.l.b16 %v825
        %v897 = vunpack.c.l.b16 %v826
        %v898 = vpack.c.b16 %v867, %v866
        %v899 = vpack.c.b16 %v869, %v868
        %v900 = vpack.c.b16 %v871, %v870
        %v901 = vpack.c.b16 %v873, %v872
        %v902 = vpack.c.b16 %v875, %v874
        %v903 = vpack.c.b16 %v877, %v876
        %v904 = vpack.c.b16 %v879, %v878
        %v905 = vpack.c.b16 %v881, %v880
        %v906 = vpack.c.b16 %v883, %v882
        %v907 = vpack.c.b16 %v885, %v884
        %v908 = vpack.c.b16 %v887, %v886
        %v909 = vpack.c.b16 %v889, %v888
        %v910 = vpack.c.b16 %v891, %v890
        %v911 = vpack.c.b16 %v893, %v892
        %v912 = vpack.c.b16 %v895, %v894
        %v913 = vpack.c.b16 %v897, %v896
        %930 = vmatprep.subr.bf16.mxu0 0
        %931 = vmatpush1.bf16.msra.mxu0 %v898
        %932 = vmatprep.subr.bf16.mxu0 0
        %933 = vmatpush1.bf16.msra.mxu0 %v899
        %934 = vmatprep.subr.bf16.mxu0 0
        %935 = vmatpush1.bf16.msra.mxu0 %v900
        %936 = vmatprep.subr.bf16.mxu0 0
        %937 = vmatpush1.bf16.msra.mxu0 %v901
        %938 = vmatprep.subr.bf16.mxu0 0
        %939 = vmatpush1.bf16.msra.mxu0 %v902
        %940 = vmatprep.subr.bf16.mxu0 0
        %941 = vmatpush1.bf16.msra.mxu0 %v903
        %942 = vmatprep.subr.bf16.mxu0 0
        %943 = vmatpush1.bf16.msra.mxu0 %v904
        %944 = vmatprep.subr.bf16.mxu0 0
        %945 = vmatpush1.bf16.msra.mxu0 %v905
        %946 = vmatprep.subr.bf16.mxu0 0
        %947 = vmatpush1.bf16.msra.mxu0 %v906
        %948 = vmatprep.subr.bf16.mxu0 0
        %949 = vmatpush1.bf16.msra.mxu0 %v907
        %950 = vmatprep.subr.bf16.mxu0 0
        %951 = vmatpush1.bf16.msra.mxu0 %v908
        %952 = vmatprep.subr.bf16.mxu0 0
        %953 = vmatpush1.bf16.msra.mxu0 %v909
        %954 = vmatprep.subr.bf16.mxu0 0
        %955 = vmatpush1.bf16.msra.mxu0 %v910
        %956 = vmatprep.subr.bf16.mxu0 0
        %957 = vmatpush1.bf16.msra.mxu0 %v911
        %958 = vmatprep.subr.bf16.mxu0 0
        %959 = vmatpush1.bf16.msra.mxu0 %v912
        %960 = vmatprep.subr.bf16.mxu0 0
        %961 = vmatpush1.bf16.msra.mxu0 %v913
        %962 = vmatprep.mubr.bf16.mxu0 %v794
        %963 = vmatmul.mubr.bf16.gmra.mrb[0].mxu0 %v793
        %v964 = vpop.f32.mrb[0].mxu0
        %v965 = vadd.f32 %v832, %v964
        %v966 = vpop.f32.mrb[0].mxu0
        %v967 = vpop.f32.mrb[0].mxu0
        %v968 = vpop.f32.mrb[0].mxu0
        %969 = vdwg.mxu0
        %v970 = vpack.c.bf16 %v965, %v965
        %971 = vst [vmem:[%s297] sm:$0xf] %v970
        %s972 = sand.u32 %s164, 1
        %s973 = scalar_lea.sflag [#allocation5], %s972
        %s974 = sand.u32 %s164, 1
        %s975 = smul.addr %s974, 4
        %s976 = scalar_lea.vmem [#allocation9], %s975
        // Predicated region
        $region57: #{tpu_custom_call.1} parent=43 // pred_check
          %p977 = pneg %p174
        $region58: #{tpu_custom_call.1} parent=43 // pred_check_branch
          %979 = sbr.rel (%p977) target = $region60
        $region59: #{tpu_custom_call.1} parent=43 // pred_region
          %s981 = ssub.s32 64, 64
          %982 = vsyncadd %s973, %s981
          %s983 = smul.addr %s25, 64
          %s984 = scalar_lea.hbm %s6, %s983
          %s986 = sshll.u32 %s976, 4
          %s987 = int_to_ptr.vmem [resolvable:$true] %s986
          %989 = dma.vmem_to_hbm [thread:$0]  %s987, 64, %s984, %s973
        $region60: #{tpu_custom_call.1} parent=43 // pred_fallthru
          _
      $region44: #{tpu_custom_call.1} parent=5 // pred_fallthru
        _
      %p990 = scmp.le.s32.totalorder 2, %s20
      // Predicated region
      $region61: #{tpu_custom_call.1} parent=5 // pred_check
        %p991 = pneg %p990
      $region62: #{tpu_custom_call.1} parent=5 // pred_check_branch
        %993 = sbr.rel (%p991) target = $region64
      $region63: #{tpu_custom_call.1} parent=5 // pred_region
        %s994 = ssub.s32 %s20, 2
        // Predicated region
        $region65: #{tpu_custom_call.1} parent=63 // pred_check
          %p995 = pneg %p180
        $region66: #{tpu_custom_call.1} parent=63 // pred_check_branch
          %997 = sbr.rel (%p995) target = $region68
        $region67: #{tpu_custom_call.1} parent=63 // pred_region
          %s998 = sand.u32 %s165, 1
          %s999 = scalar_lea.sflag [#allocation5], %s998
          %s1000 = sand.u32 %s165, 1
          %s1001 = smul.addr %s1000, 4
          %s1002 = scalar_lea.vmem [#allocation9], %s1001
          %1003 = dma.done %s999, 64
        $region68: #{tpu_custom_call.1} parent=63 // pred_fallthru
          _
      $region64: #{tpu_custom_call.1} parent=5 // pred_fallthru
        _
    $region6: #{tpu_custom_call.1} parent=1 // loop_footer
      %s24 = sadd.s32 1, %s20
    $region7: #{tpu_custom_call.1} parent=1 // loop_footer_branch
      %19 = sbr.rel target = $region3
    $region8: #{tpu_custom_call.1} parent=1 // loop_exit
      _
    %1004 = vsyncpa [#allocation4], 1
    %s1005 = scalar_lea.sflag [#allocation4], 1
    %1006 = vsyncpa %s1005, 1
    %1007 = vsyncpa [#allocation7], 1
    %1008 = vsyncpa [#allocation5], 1
    %s1009 = scalar_lea.sflag [#allocation5], 1
    %1010 = vsyncpa %s1009, 1

</llo_original>
